<compile_context>
chip_gen: v7x
topology: tpu7x:2x2x1
jax: 0.10.0
libtpu: 0.0.40
codegen_flags: <defaults>
</compile_context>

<pallas_src>
import jax
import jax.numpy as jnp
from jax.experimental import pallas as pl
from jax.experimental.pallas import tpu as pltpu


def _se_kernel(x_ref, w1t_ref, w2t_ref, o_ref):
    # x_ref : (BB, HW, C)   channels-last, C on lanes
    # w1t_ref: (C, Cr)      fc1 weight, pre-transposed
    # w2t_ref: (Cr, C)      fc2 weight, pre-transposed
    # o_ref : (BB, HW, C)
    x = x_ref[...]
    hw = x.shape[1]

    # --- squeeze: global average pool over spatial (sublane reduction) ---
    pooled = jnp.sum(x.astype(jnp.float32), axis=1) * (1.0 / hw)      # (BB, C)

    # --- excitation: batched fc1 -> relu -> fc2 -> sigmoid ---
    h = jnp.dot(pooled, w1t_ref[...], preferred_element_type=jnp.float32)  # (BB, Cr)
    h = jnp.maximum(h, 0.0)
    s = jnp.dot(h, w2t_ref[...], preferred_element_type=jnp.float32)       # (BB, C)
    s = jax.nn.sigmoid(s)

    # --- scale: broadcast over spatial, lane-dense store ---
    o_ref[...] = (x * s[:, None, :]).astype(o_ref.dtype)


def se_module(x, w1, w2, *, max_block_budget_bytes=48 * 1024 * 1024):
    """x: (N, C, H, W); w1: (C//r, C); w2: (C, C//r). Returns (N, C, H, W)."""
    N, C, H, W = x.shape
    Cr = w1.shape[0]
    HW = H * W

    # channels-last slab for the kernel; weights pre-transposed for (B,C)@(C,Cr)
    x_cl = jnp.transpose(x.reshape(N, C, HW), (0, 2, 1))   # (N, HW, C)
    w1t = jnp.transpose(w1).astype(jnp.float32)            # (C, Cr)
    w2t = jnp.transpose(w2).astype(jnp.float32)            # (Cr, C)

    itemsize = jnp.dtype(x.dtype).itemsize
    w_bytes = 2 * 2 * C * Cr * 4  # double-buffered fc1 + fc2 weights

    # Largest BB dividing N whose pipelined footprint (2x in + 2x out blocks
    # + weights) fits the budget.
    BB = 1
    for cand in range(N, 0, -1):
        if N % cand == 0 and 4 * cand * HW * C * itemsize + w_bytes <= max_block_budget_bytes:
            BB = cand
            break

    vmem_needed = 4 * BB * HW * C * itemsize + w_bytes + (2 << 20)  # + headroom
    vmem_limit = int(min(max(vmem_needed, 16 * 1024 * 1024), 64 * 1024 * 1024))

    out_cl = pl.pallas_call(
        _se_kernel,
        out_shape=jax.ShapeDtypeStruct((N, HW, C), x.dtype),
        grid_spec=pltpu.PrefetchScalarGridSpec(
            num_scalar_prefetch=0,
            grid=(N // BB,),
            in_specs=[
                pl.BlockSpec((BB, HW, C), lambda n: (n, 0, 0)),
                pl.BlockSpec((C, Cr), lambda n: (0, 0)),
                pl.BlockSpec((Cr, C), lambda n: (0, 0)),
            ],
            out_specs=pl.BlockSpec((BB, HW, C), lambda n: (n, 0, 0)),
        ),
        compiler_params=pltpu.CompilerParams(
            dimension_semantics=("parallel",),
            vmem_limit_bytes=vmem_limit,
        ),
    )(x_cl, w1t, w2t)

    return jnp.transpose(out_cl, (0, 2, 1)).reshape(N, C, H, W)


def _reference(x, w1, w2):
    pooled = jnp.mean(x, axis=(2, 3), keepdims=True)              # (N, C, 1, 1)
    h = jnp.einsum("oc,nchw->nohw", w1, pooled)                    # (N, Cr, 1, 1)
    h = jnp.maximum(h, 0.0)
    s = jnp.einsum("co,nohw->nchw", w2, h)                         # (N, C, 1, 1)
    s = jax.nn.sigmoid(s)
    return x * s


if __name__ == "__main__":
    key = jax.random.PRNGKey(0)
    k_x, k_w1, k_w2 = jax.random.split(key, 3)

    N, C, H, W = 2, 4, 16, 16
    reduction = 2
    Cr = C // reduction

    x = jax.random.normal(k_x, (N, C, H, W), dtype=jnp.float32)
    # synthetic Conv2d(kernel_size=1, bias=False) weights, squeezed to 2-D
    w1 = jax.random.normal(k_w1, (Cr, C), dtype=jnp.float32) * 0.1
    w2 = jax.random.normal(k_w2, (C, Cr), dtype=jnp.float32) * 0.1

    out = se_module(x, w1, w2)
    jax.block_until_ready(out)

    ref = _reference(x, w1, w2)
    assert jnp.allclose(out, ref, atol=1e-5, rtol=1e-5), "mismatch vs reference"

    print("KERNEL_OK")
</pallas_src>

<mosaic_0001>
module attributes {stable_mosaic.version = 11 : i64} {
  func.func @_se_kernel(%arg0: i32, %arg1: memref<2x256x4xf32, #tpu.memory_space<vmem>>, %arg2: memref<4x2xf32, #tpu.memory_space<vmem>>, %arg3: memref<2x4xf32, #tpu.memory_space<vmem>>, %arg4: memref<2x256x4xf32, #tpu.memory_space<vmem>>) attributes {dimension_semantics = [#tpu.dimension_semantics<parallel>], iteration_bounds = array<i64: 1>, scalar_prefetch = 0 : i64, scratch_operands = 0 : i64, tpu.core_type = #tpu.core_type<tc>, window_params = [{transform_indices = @transform_0, window_bounds = array<i64: 2, 256, 4>}, {pipeline_mode = #tpu.pipeline_mode<synchronous>, transform_indices = @transform_1, window_bounds = array<i64: 4, 2>}, {pipeline_mode = #tpu.pipeline_mode<synchronous>, transform_indices = @transform_2, window_bounds = array<i64: 2, 4>}, {transform_indices = @transform_3, window_bounds = array<i64: 2, 256, 4>}]} {
    %c0 = arith.constant 0 : index
    %c0_0 = arith.constant 0 : index
    %c0_1 = arith.constant 0 : index
    %0 = vector.load %arg1[%c0, %c0_0, %c0_1] : memref<2x256x4xf32, #tpu.memory_space<vmem>>, vector<2x256x4xf32>
    %cst = arith.constant dense<0.000000e+00> : vector<2x4xf32>
    %1 = vector.multi_reduction <add>, %0, %cst [1] : vector<2x256x4xf32> to vector<2x4xf32>
    %cst_2 = arith.constant 3.906250e-03 : f32
    %2 = vector.broadcast %cst_2 : f32 to vector<2x4xf32>
    %3 = arith.mulf %1, %2 : vector<2x4xf32>
    %c0_3 = arith.constant 0 : index
    %c0_4 = arith.constant 0 : index
    %4 = vector.load %arg2[%c0_3, %c0_4] : memref<4x2xf32, #tpu.memory_space<vmem>>, vector<4x2xf32>
    %cst_5 = arith.constant dense<0.000000e+00> : vector<2x2xf32>
    %5 = tpu.matmul %3, %4, %cst_5 {dimension_numbers = #tpu.dot_dimension_numbers<[1], [0], [0], [1], [0, 0, 1, 1], [], []>} : vector<2x4xf32>, vector<4x2xf32>, vector<2x2xf32> -> vector<2x2xf32>
    %cst_6 = arith.constant 0.000000e+00 : f32
    %6 = vector.broadcast %cst_6 : f32 to vector<2x2xf32>
    %7 = arith.maximumf %5, %6 : vector<2x2xf32>
    %c0_7 = arith.constant 0 : index
    %c0_8 = arith.constant 0 : index
    %8 = vector.load %arg3[%c0_7, %c0_8] : memref<2x4xf32, #tpu.memory_space<vmem>>, vector<2x4xf32>
    %cst_9 = arith.constant dense<0.000000e+00> : vector<2x4xf32>
    %9 = tpu.matmul %7, %8, %cst_9 {dimension_numbers = #tpu.dot_dimension_numbers<[1], [0], [0], [1], [0, 0, 1, 1], [], []>} : vector<2x2xf32>, vector<2x4xf32>, vector<2x4xf32> -> vector<2x4xf32>
    %10 = arith.negf %9 : vector<2x4xf32>
    %11 = math.exp %10 : vector<2x4xf32>
    %cst_10 = arith.constant 1.000000e+00 : f32
    %12 = vector.broadcast %cst_10 : f32 to vector<2x4xf32>
    %13 = arith.addf %12, %11 : vector<2x4xf32>
    %14 = arith.divf %12, %13 : vector<2x4xf32>
    %15 = vector.shape_cast %14 : vector<2x4xf32> to vector<2x1x4xf32>
    %16 = vector.broadcast %15 : vector<2x1x4xf32> to vector<2x256x4xf32>
    %17 = arith.mulf %0, %16 : vector<2x256x4xf32>
    %c0_11 = arith.constant 0 : index
    %c0_12 = arith.constant 0 : index
    %c0_13 = arith.constant 0 : index
    %18 = vector.load %arg4[%c0_11, %c0_12, %c0_13] : memref<2x256x4xf32, #tpu.memory_space<vmem>>, vector<2x256x4xf32>
    tpu.vector_store %arg4[%c0_11, %c0_12, %c0_13], %17 {strides = array<i32>} : memref<2x256x4xf32, #tpu.memory_space<vmem>>, vector<2x256x4xf32>,
    return
  }
  func.func @transform_0(%arg0: i32) -> (i32, i32, i32) {
    %c0_i32 = arith.constant 0 : i32
    %c0_i32_0 = arith.constant 0 : i32
    %c0_i32_1 = arith.constant 0 : i32
    return %arg0, %c0_i32, %c0_i32_0 : i32, i32, i32
  }
  func.func @transform_1(%arg0: i32) -> (i32, i32) {
    %c0_i32 = arith.constant 0 : i32
    %c0_i32_0 = arith.constant 0 : i32
    %c0_i32_1 = arith.constant 0 : i32
    return %c0_i32, %c0_i32_0 : i32, i32
  }
  func.func @transform_2(%arg0: i32) -> (i32, i32) {
    %c0_i32 = arith.constant 0 : i32
    %c0_i32_0 = arith.constant 0 : i32
    %c0_i32_1 = arith.constant 0 : i32
    return %c0_i32, %c0_i32_0 : i32, i32
  }
  func.func @transform_3(%arg0: i32) -> (i32, i32, i32) {
    %c0_i32 = arith.constant 0 : i32
    %c0_i32_0 = arith.constant 0 : i32
    %c0_i32_1 = arith.constant 0 : i32
    return %arg0, %c0_i32, %c0_i32_0 : i32, i32, i32
  }
}

</mosaic_0001>

<llo_original>
// kernel: tpu_custom_call.1
$region0: #{tpu_custom_call.1}
  #allocation0 [shape = 'u32[]', space=smem, size = 0x4, offset = 0x4, fixed_abs, tag = 'smem constant byte address 0x4 - core index']
  #allocation1 [shape = 'u32[144,128]{1,0:T(1,128)}', space=vmem, size = 0x12000, scoped, tag = 'internal scratch']
  %s0 = inlined_call_operand.vmem [shape: f32[2,256,4], index: 0, kind: input, shape index: {}]
  %s1 = inlined_call_operand.vmem [shape: f32[4,2], index: 1, kind: input, shape index: {}]
  %s2 = inlined_call_operand.vmem [shape: f32[2,4], index: 2, kind: input, shape index: {}]
  %s3 = inlined_call_operand.vmem [shape: f32[2,256,4], index: 3, kind: output, shape index: {}]
  %s4 = sld [smem:[#allocation0]]
  $region22: #{tpu_custom_call.1} parent=0
    _
  %s6 = ssub.s32 1, %s4
  %s7 = scalar_select 0, %s6, %s4
  // Predicated region
  $region2: #{tpu_custom_call.1} parent=0 // pred_check
    _
  $region3: #{tpu_custom_call.1} parent=0 // pred_check_branch
    %9 = sbr.rel (0) target = $region5
  $region4: #{tpu_custom_call.1} parent=0 // pred_region
    _
  $region5: #{tpu_custom_call.1} parent=0 // pred_fallthru
    _
  // Predicated region
  $region6: #{tpu_custom_call.1} parent=0 // pred_check
    _
  $region7: #{tpu_custom_call.1} parent=0 // pred_check_branch
    %11 = sbr.rel (0) target = $region9
  $region8: #{tpu_custom_call.1} parent=0 // pred_region
    _
  $region9: #{tpu_custom_call.1} parent=0 // pred_fallthru
    _
  // Predicated region
  $region10: #{tpu_custom_call.1} parent=0 // pred_check
    _
  $region11: #{tpu_custom_call.1} parent=0 // pred_check_branch
    %13 = sbr.rel (0) target = $region13
  $region12: #{tpu_custom_call.1} parent=0 // pred_region
    _
  $region13: #{tpu_custom_call.1} parent=0 // pred_fallthru
    _
  %v14 = vld [vmem:[%s0] sm:$0xff]
  %v15 = vld [vmem:[%s0 + $0x8] sm:$0xff]
  %v16 = vld [vmem:[%s0 + $0x10] sm:$0xff]
  %v17 = vld [vmem:[%s0 + $0x18] sm:$0xff]
  %v18 = vld [vmem:[%s0 + $0x20] sm:$0xff]
  %v19 = vld [vmem:[%s0 + $0x28] sm:$0xff]
  %v20 = vld [vmem:[%s0 + $0x30] sm:$0xff]
  %v21 = vld [vmem:[%s0 + $0x38] sm:$0xff]
  %v22 = vld [vmem:[%s0 + $0x40] sm:$0xff]
  %v23 = vld [vmem:[%s0 + $0x48] sm:$0xff]
  %v24 = vld [vmem:[%s0 + $0x50] sm:$0xff]
  %v25 = vld [vmem:[%s0 + $0x58] sm:$0xff]
  %v26 = vld [vmem:[%s0 + $0x60] sm:$0xff]
  %v27 = vld [vmem:[%s0 + $0x68] sm:$0xff]
  %v28 = vld [vmem:[%s0 + $0x70] sm:$0xff]
  %v29 = vld [vmem:[%s0 + $0x78] sm:$0xff]
  %v30 = vld [vmem:[%s0 + $0x80] sm:$0xff]
  %v31 = vld [vmem:[%s0 + $0x88] sm:$0xff]
  %v32 = vld [vmem:[%s0 + $0x90] sm:$0xff]
  %v33 = vld [vmem:[%s0 + $0x98] sm:$0xff]
  %v34 = vld [vmem:[%s0 + $0xa0] sm:$0xff]
  %v35 = vld [vmem:[%s0 + $0xa8] sm:$0xff]
  %v36 = vld [vmem:[%s0 + $0xb0] sm:$0xff]
  %v37 = vld [vmem:[%s0 + $0xb8] sm:$0xff]
  %v38 = vld [vmem:[%s0 + $0xc0] sm:$0xff]
  %v39 = vld [vmem:[%s0 + $0xc8] sm:$0xff]
  %v40 = vld [vmem:[%s0 + $0xd0] sm:$0xff]
  %v41 = vld [vmem:[%s0 + $0xd8] sm:$0xff]
  %v42 = vld [vmem:[%s0 + $0xe0] sm:$0xff]
  %v43 = vld [vmem:[%s0 + $0xe8] sm:$0xff]
  %v44 = vld [vmem:[%s0 + $0xf0] sm:$0xff]
  %v45 = vld [vmem:[%s0 + $0xf8] sm:$0xff]
  %v46 = vld [vmem:[%s0 + $0x100] sm:$0xff]
  %v47 = vld [vmem:[%s0 + $0x108] sm:$0xff]
  %v48 = vld [vmem:[%s0 + $0x110] sm:$0xff]
  %v49 = vld [vmem:[%s0 + $0x118] sm:$0xff]
  %v50 = vld [vmem:[%s0 + $0x120] sm:$0xff]
  %v51 = vld [vmem:[%s0 + $0x128] sm:$0xff]
  %v52 = vld [vmem:[%s0 + $0x130] sm:$0xff]
  %v53 = vld [vmem:[%s0 + $0x138] sm:$0xff]
  %v54 = vld [vmem:[%s0 + $0x140] sm:$0xff]
  %v55 = vld [vmem:[%s0 + $0x148] sm:$0xff]
  %v56 = vld [vmem:[%s0 + $0x150] sm:$0xff]
  %v57 = vld [vmem:[%s0 + $0x158] sm:$0xff]
  %v58 = vld [vmem:[%s0 + $0x160] sm:$0xff]
  %v59 = vld [vmem:[%s0 + $0x168] sm:$0xff]
  %v60 = vld [vmem:[%s0 + $0x170] sm:$0xff]
  %v61 = vld [vmem:[%s0 + $0x178] sm:$0xff]
  %v62 = vld [vmem:[%s0 + $0x180] sm:$0xff]
  %v63 = vld [vmem:[%s0 + $0x188] sm:$0xff]
  %v64 = vld [vmem:[%s0 + $0x190] sm:$0xff]
  %v65 = vld [vmem:[%s0 + $0x198] sm:$0xff]
  %v66 = vld [vmem:[%s0 + $0x1a0] sm:$0xff]
  %v67 = vld [vmem:[%s0 + $0x1a8] sm:$0xff]
  %v68 = vld [vmem:[%s0 + $0x1b0] sm:$0xff]
  %v69 = vld [vmem:[%s0 + $0x1b8] sm:$0xff]
  %v70 = vld [vmem:[%s0 + $0x1c0] sm:$0xff]
  %v71 = vld [vmem:[%s0 + $0x1c8] sm:$0xff]
  %v72 = vld [vmem:[%s0 + $0x1d0] sm:$0xff]
  %v73 = vld [vmem:[%s0 + $0x1d8] sm:$0xff]
  %v74 = vld [vmem:[%s0 + $0x1e0] sm:$0xff]
  %v75 = vld [vmem:[%s0 + $0x1e8] sm:$0xff]
  %v76 = vld [vmem:[%s0 + $0x1f0] sm:$0xff]
  %v77 = vld [vmem:[%s0 + $0x1f8] sm:$0xff]
  %vm78 = vcmask 31744
  %v79 = vsel %vm78, %v14, 0.0
  %v80 = vsel %vm78, %v15, 0.0
  %v81 = vadd.f32 %v79, %v80
  %v82 = vsel %vm78, %v16, 0.0
  %v83 = vadd.f32 %v81, %v82
  %v84 = vsel %vm78, %v17, 0.0
  %v85 = vadd.f32 %v83, %v84
  %v86 = vsel %vm78, %v18, 0.0
  %v87 = vadd.f32 %v85, %v86
  %v88 = vsel %vm78, %v19, 0.0
  %v89 = vadd.f32 %v87, %v88
  %v90 = vsel %vm78, %v20, 0.0
  %v91 = vadd.f32 %v89, %v90
  %v92 = vsel %vm78, %v21, 0.0
  %v93 = vadd.f32 %v91, %v92
  %v94 = vsel %vm78, %v22, 0.0
  %v95 = vadd.f32 %v93, %v94
  %v96 = vsel %vm78, %v23, 0.0
  %v97 = vadd.f32 %v95, %v96
  %v98 = vsel %vm78, %v24, 0.0
  %v99 = vadd.f32 %v97, %v98
  %v100 = vsel %vm78, %v25, 0.0
  %v101 = vadd.f32 %v99, %v100
  %v102 = vsel %vm78, %v26, 0.0
  %v103 = vadd.f32 %v101, %v102
  %v104 = vsel %vm78, %v27, 0.0
  %v105 = vadd.f32 %v103, %v104
  %v106 = vsel %vm78, %v28, 0.0
  %v107 = vadd.f32 %v105, %v106
  %v108 = vsel %vm78, %v29, 0.0
  %v109 = vadd.f32 %v107, %v108
  %v110 = vsel %vm78, %v30, 0.0
  %v111 = vadd.f32 %v109, %v110
  %v112 = vsel %vm78, %v31, 0.0
  %v113 = vadd.f32 %v111, %v112
  %v114 = vsel %vm78, %v32, 0.0
  %v115 = vadd.f32 %v113, %v114
  %v116 = vsel %vm78, %v33, 0.0
  %v117 = vadd.f32 %v115, %v116
  %v118 = vsel %vm78, %v34, 0.0
  %v119 = vadd.f32 %v117, %v118
  %v120 = vsel %vm78, %v35, 0.0
  %v121 = vadd.f32 %v119, %v120
  %v122 = vsel %vm78, %v36, 0.0
  %v123 = vadd.f32 %v121, %v122
  %v124 = vsel %vm78, %v37, 0.0
  %v125 = vadd.f32 %v123, %v124
  %v126 = vsel %vm78, %v38, 0.0
  %v127 = vadd.f32 %v125, %v126
  %v128 = vsel %vm78, %v39, 0.0
  %v129 = vadd.f32 %v127, %v128
  %v130 = vsel %vm78, %v40, 0.0
  %v131 = vadd.f32 %v129, %v130
  %v132 = vsel %vm78, %v41, 0.0
  %v133 = vadd.f32 %v131, %v132
  %v134 = vsel %vm78, %v42, 0.0
  %v135 = vadd.f32 %v133, %v134
  %v136 = vsel %vm78, %v43, 0.0
  %v137 = vadd.f32 %v135, %v136
  %v138 = vsel %vm78, %v44, 0.0
  %v139 = vadd.f32 %v137, %v138
  %v140 = vsel %vm78, %v45, 0.0
  %v141 = vadd.f32 %v139, %v140
  %v142 = vrot.slane %v141, 4
  %v143 = vadd.f32 %v141, %v142
  %v144 = vrot.slane %v143, 2
  %v145 = vadd.f32 %v143, %v144
  %v146 = vrot.slane %v145, 1
  %v147 = vadd.f32 %v145, %v146
  %v148 = vsel %vm78, %v46, 0.0
  %v149 = vsel %vm78, %v47, 0.0
  %v150 = vadd.f32 %v148, %v149
  %v151 = vsel %vm78, %v48, 0.0
  %v152 = vadd.f32 %v150, %v151
  %v153 = vsel %vm78, %v49, 0.0
  %v154 = vadd.f32 %v152, %v153
  %v155 = vsel %vm78, %v50, 0.0
  %v156 = vadd.f32 %v154, %v155
  %v157 = vsel %vm78, %v51, 0.0
  %v158 = vadd.f32 %v156, %v157
  %v159 = vsel %vm78, %v52, 0.0
  %v160 = vadd.f32 %v158, %v159
  %v161 = vsel %vm78, %v53, 0.0
  %v162 = vadd.f32 %v160, %v161
  %v163 = vsel %vm78, %v54, 0.0
  %v164 = vadd.f32 %v162, %v163
  %v165 = vsel %vm78, %v55, 0.0
  %v166 = vadd.f32 %v164, %v165
  %v167 = vsel %vm78, %v56, 0.0
  %v168 = vadd.f32 %v166, %v167
  %v169 = vsel %vm78, %v57, 0.0
  %v170 = vadd.f32 %v168, %v169
  %v171 = vsel %vm78, %v58, 0.0
  %v172 = vadd.f32 %v170, %v171
  %v173 = vsel %vm78, %v59, 0.0
  %v174 = vadd.f32 %v172, %v173
  %v175 = vsel %vm78, %v60, 0.0
  %v176 = vadd.f32 %v174, %v175
  %v177 = vsel %vm78, %v61, 0.0
  %v178 = vadd.f32 %v176, %v177
  %v179 = vsel %vm78, %v62, 0.0
  %v180 = vadd.f32 %v178, %v179
  %v181 = vsel %vm78, %v63, 0.0
  %v182 = vadd.f32 %v180, %v181
  %v183 = vsel %vm78, %v64, 0.0
  %v184 = vadd.f32 %v182, %v183
  %v185 = vsel %vm78, %v65, 0.0
  %v186 = vadd.f32 %v184, %v185
  %v187 = vsel %vm78, %v66, 0.0
  %v188 = vadd.f32 %v186, %v187
  %v189 = vsel %vm78, %v67, 0.0
  %v190 = vadd.f32 %v188, %v189
  %v191 = vsel %vm78, %v68, 0.0
  %v192 = vadd.f32 %v190, %v191
  %v193 = vsel %vm78, %v69, 0.0
  %v194 = vadd.f32 %v192, %v193
  %v195 = vsel %vm78, %v70, 0.0
  %v196 = vadd.f32 %v194, %v195
  %v197 = vsel %vm78, %v71, 0.0
  %v198 = vadd.f32 %v196, %v197
  %v199 = vsel %vm78, %v72, 0.0
  %v200 = vadd.f32 %v198, %v199
  %v201 = vsel %vm78, %v73, 0.0
  %v202 = vadd.f32 %v200, %v201
  %v203 = vsel %vm78, %v74, 0.0
  %v204 = vadd.f32 %v202, %v203
  %v205 = vsel %vm78, %v75, 0.0
  %v206 = vadd.f32 %v204, %v205
  %v207 = vsel %vm78, %v76, 0.0
  %v208 = vadd.f32 %v206, %v207
  %v209 = vsel %vm78, %v77, 0.0
  %v210 = vadd.f32 %v208, %v209
  %v211 = vrot.slane %v210, 4
  %v212 = vadd.f32 %v210, %v211
  %v213 = vrot.slane %v212, 2
  %v214 = vadd.f32 %v212, %v213
  %v215 = vrot.slane %v214, 1
  %v216 = vadd.f32 %v214, %v215
  %v217 = vmul.f32 %v147, 0.00390625
  %v218 = vmul.f32 %v216, 0.00390625
  %v219 = vld [vmem:[%s1] sm:$0xf]
  %vm222 = vcmask 1041409
  %v223 = vsel %vm222, %v218, %v217
  %v224 = vsel %vm78, %v223, 0
  %vm226 = vcmask 1043456
  %v228 = vsel %vm226, %v219, 0
  %230 = vmatprep.subr.mxu0 0.0
  %231 = vmatpush1.msra.mxu0 %v228
  %232 = vmatprep.subr.mxu0 0.0
  %233 = vmatpush1.msra.mxu0 0.0
  %234 = vmatprep.subr.mxu0 0.0
  %235 = vmatpush1.msra.mxu0 0.0
  %236 = vmatprep.subr.mxu0 0.0
  %237 = vmatpush1.msra.mxu0 0.0
  %238 = vmatprep.subr.mxu0 0.0
  %239 = vmatpush1.msra.mxu0 0.0
  %240 = vmatprep.subr.mxu0 0.0
  %241 = vmatpush1.msra.mxu0 0.0
  %242 = vmatprep.subr.mxu0 0.0
  %243 = vmatpush1.msra.mxu0 0.0
  %244 = vmatprep.subr.mxu0 0.0
  %245 = vmatpush1.msra.mxu0 0.0
  %246 = vmatprep.subr.mxu0 0.0
  %247 = vmatpush1.msra.mxu0 0.0
  %248 = vmatprep.subr.mxu0 0.0
  %249 = vmatpush1.msra.mxu0 0.0
  %250 = vmatprep.subr.mxu0 0.0
  %251 = vmatpush1.msra.mxu0 0.0
  %252 = vmatprep.subr.mxu0 0.0
  %253 = vmatpush1.msra.mxu0 0.0
  %254 = vmatprep.subr.mxu0 0.0
  %255 = vmatpush1.msra.mxu0 0.0
  %256 = vmatprep.subr.mxu0 0.0
  %257 = vmatpush1.msra.mxu0 0.0
  %258 = vmatprep.subr.mxu0 0.0
  %259 = vmatpush1.msra.mxu0 0.0
  %260 = vmatprep.subr.mxu0 0.0
  %261 = vmatpush1.msra.mxu0 0.0
  %262 = vmatprep.subr.mxu0 0.0
  %263 = vmatpush1.msra.mxu0 0.0
  %264 = vmatprep.subr.mxu0 0.0
  %265 = vmatpush1.msra.mxu0 0.0
  %266 = vmatprep.subr.mxu0 0.0
  %267 = vmatpush1.msra.mxu0 0.0
  %268 = vmatprep.subr.mxu0 0.0
  %269 = vmatpush1.msra.mxu0 0.0
  %270 = vmatprep.subr.mxu0 0.0
  %271 = vmatpush1.msra.mxu0 0.0
  %272 = vmatprep.subr.mxu0 0.0
  %273 = vmatpush1.msra.mxu0 0.0
  %274 = vmatprep.subr.mxu0 0.0
  %275 = vmatpush1.msra.mxu0 0.0
  %276 = vmatprep.subr.mxu0 0.0
  %277 = vmatpush1.msra.mxu0 0.0
  %278 = vmatprep.subr.mxu0 0.0
  %279 = vmatpush1.msra.mxu0 0.0
  %280 = vmatprep.subr.mxu0 0.0
  %281 = vmatpush1.msra.mxu0 0.0
  %282 = vmatprep.subr.mxu0 0.0
  %283 = vmatpush1.msra.mxu0 0.0
  %284 = vmatprep.subr.mxu0 0.0
  %285 = vmatpush1.msra.mxu0 0.0
  %286 = vmatprep.subr.mxu0 0.0
  %287 = vmatpush1.msra.mxu0 0.0
  %288 = vmatprep.subr.mxu0 0.0
  %289 = vmatpush1.msra.mxu0 0.0
  %290 = vmatprep.subr.mxu0 0.0
  %291 = vmatpush1.msra.mxu0 0.0
  %292 = vmatprep.subr.mxu0 0.0
  %293 = vmatpush1.msra.mxu0 0.0
  %294 = vmatprep.mubr.f32.mxu0 0.0
  %295 = vmatmul.mubr.f32.gmra.mrb[0].mxu0 %v224
  %v296 = vpop.f32.mrb[0].mxu0
  %v297 = vadd.f32 0.0, %v296
  %v298 = vpop.f32.mrb[0].mxu0
  %299 = vdwg.mxu0
  %v300 = vmax.f32 %v297, 0.0
  %v301 = vld [vmem:[%s2] sm:$0x3]
  %vm302 = vcmask 15360
  %v304 = vsel %vm302, %v300, 0
  %vm306 = vcmask 1041408
  %v308 = vsel %vm306, %v301, 0
  %310 = vmatprep.subr.mxu0 0.0
  %311 = vmatpush1.msra.mxu0 %v308
  %312 = vmatprep.subr.mxu0 0.0
  %313 = vmatpush1.msra.mxu0 0.0
  %314 = vmatprep.subr.mxu0 0.0
  %315 = vmatpush1.msra.mxu0 0.0
  %316 = vmatprep.subr.mxu0 0.0
  %317 = vmatpush1.msra.mxu0 0.0
  %318 = vmatprep.subr.mxu0 0.0
  %319 = vmatpush1.msra.mxu0 0.0
  %320 = vmatprep.subr.mxu0 0.0
  %321 = vmatpush1.msra.mxu0 0.0
  %322 = vmatprep.subr.mxu0 0.0
  %323 = vmatpush1.msra.mxu0 0.0
  %324 = vmatprep.subr.mxu0 0.0
  %325 = vmatpush1.msra.mxu0 0.0
  %326 = vmatprep.subr.mxu0 0.0
  %327 = vmatpush1.msra.mxu0 0.0
  %328 = vmatprep.subr.mxu0 0.0
  %329 = vmatpush1.msra.mxu0 0.0
  %330 = vmatprep.subr.mxu0 0.0
  %331 = vmatpush1.msra.mxu0 0.0
  %332 = vmatprep.subr.mxu0 0.0
  %333 = vmatpush1.msra.mxu0 0.0
  %334 = vmatprep.subr.mxu0 0.0
  %335 = vmatpush1.msra.mxu0 0.0
  %336 = vmatprep.subr.mxu0 0.0
  %337 = vmatpush1.msra.mxu0 0.0
  %338 = vmatprep.subr.mxu0 0.0
  %339 = vmatpush1.msra.mxu0 0.0
  %340 = vmatprep.subr.mxu0 0.0
  %341 = vmatpush1.msra.mxu0 0.0
  %342 = vmatprep.subr.mxu0 0.0
  %343 = vmatpush1.msra.mxu0 0.0
  %344 = vmatprep.subr.mxu0 0.0
  %345 = vmatpush1.msra.mxu0 0.0
  %346 = vmatprep.subr.mxu0 0.0
  %347 = vmatpush1.msra.mxu0 0.0
  %348 = vmatprep.subr.mxu0 0.0
  %349 = vmatpush1.msra.mxu0 0.0
  %350 = vmatprep.subr.mxu0 0.0
  %351 = vmatpush1.msra.mxu0 0.0
  %352 = vmatprep.subr.mxu0 0.0
  %353 = vmatpush1.msra.mxu0 0.0
  %354 = vmatprep.subr.mxu0 0.0
  %355 = vmatpush1.msra.mxu0 0.0
  %356 = vmatprep.subr.mxu0 0.0
  %357 = vmatpush1.msra.mxu0 0.0
  %358 = vmatprep.subr.mxu0 0.0
  %359 = vmatpush1.msra.mxu0 0.0
  %360 = vmatprep.subr.mxu0 0.0
  %361 = vmatpush1.msra.mxu0 0.0
  %362 = vmatprep.subr.mxu0 0.0
  %363 = vmatpush1.msra.mxu0 0.0
  %364 = vmatprep.subr.mxu0 0.0
  %365 = vmatpush1.msra.mxu0 0.0
  %366 = vmatprep.subr.mxu0 0.0
  %367 = vmatpush1.msra.mxu0 0.0
  %368 = vmatprep.subr.mxu0 0.0
  %369 = vmatpush1.msra.mxu0 0.0
  %370 = vmatprep.subr.mxu0 0.0
  %371 = vmatpush1.msra.mxu0 0.0
  %372 = vmatprep.subr.mxu0 0.0
  %373 = vmatpush1.msra.mxu0 0.0
  %374 = vmatprep.mubr.f32.mxu0 0.0
  %375 = vmatmul.mubr.f32.gmra.mrb[0].mxu0 %v304
  %v376 = vpop.f32.mrb[0].mxu0
  %v377 = vadd.f32 0.0, %v376
  %v378 = vpop.f32.mrb[0].mxu0
  %379 = vdwg.mxu0
  %v380 = vxor.u32 %v377, 2147483648
  %v381 = vmul.f32 %v380, 1.442695
  %v382 = vpow.pop %v381
  %v383 = vadd.f32 %v382, 1.0
  %v384 = vrcp.pop %v383
  %v385 = vmul.f32 1.0, %v384
  %v388 = vunpack.c.l.s4 1966171168
  %v389 = vunpack.c.0.s8 %v388
  %v390 = vlaneseq
  %v391 = vshrl.u32 %v390, 7
  %v392 = vsub.s32 %v389, %v391
  %v393 = vrot.slane %v385, %v392
  %v394 = vcombine.high %v393, %v393
  %v396 = vunpack.c.l.s4 1966171168
  %v397 = vunpack.c.0.s8 %v396
  %v398 = vlaneseq
  %v399 = vshrl.u32 %v398, 7
  %v400 = vsub.s32 %v397, %v399
  %v401 = vrot.slane %v393, %v400
  %v403 = vunpack.c.l.s4 1966171168
  %v404 = vunpack.c.0.s8 %v403
  %v405 = vlaneseq
  %v406 = vshrl.u32 %v405, 7
  %v407 = vsub.s32 %v404, %v406
  %v408 = vrot.slane %v394, %v407
  %v409 = vlaneseq
  %v410 = vshrl.u32 %v409, 7
  %v411 = vsub.s32 0, %v410
  %v412 = vrot.slane %v401, %v411
  %v413 = vlaneseq
  %v414 = vshrl.u32 %v413, 7
  %v415 = vsub.s32 0, %v414
  %v416 = vrot.slane %v408, %v415
  %v419 = vmul.f32 %v14, %v412
  %v420 = vmul.f32 %v15, %v412
  %v421 = vmul.f32 %v16, %v412
  %v422 = vmul.f32 %v17, %v412
  %v423 = vmul.f32 %v18, %v412
  %v424 = vmul.f32 %v19, %v412
  %v425 = vmul.f32 %v20, %v412
  %v426 = vmul.f32 %v21, %v412
  %v427 = vmul.f32 %v22, %v412
  %v428 = vmul.f32 %v23, %v412
  %v429 = vmul.f32 %v24, %v412
  %v430 = vmul.f32 %v25, %v412
  %v431 = vmul.f32 %v26, %v412
  %v432 = vmul.f32 %v27, %v412
  %v433 = vmul.f32 %v28, %v412
  %v434 = vmul.f32 %v29, %v412
  %v435 = vmul.f32 %v30, %v412
  %v436 = vmul.f32 %v31, %v412
  %v437 = vmul.f32 %v32, %v412
  %v438 = vmul.f32 %v33, %v412
  %v439 = vmul.f32 %v34, %v412
  %v440 = vmul.f32 %v35, %v412
  %v441 = vmul.f32 %v36, %v412
  %v442 = vmul.f32 %v37, %v412
  %v443 = vmul.f32 %v38, %v412
  %v444 = vmul.f32 %v39, %v412
  %v445 = vmul.f32 %v40, %v412
  %v446 = vmul.f32 %v41, %v412
  %v447 = vmul.f32 %v42, %v412
  %v448 = vmul.f32 %v43, %v412
  %v449 = vmul.f32 %v44, %v412
  %v450 = vmul.f32 %v45, %v412
  %v451 = vmul.f32 %v46, %v416
  %v452 = vmul.f32 %v47, %v416
  %v453 = vmul.f32 %v48, %v416
  %v454 = vmul.f32 %v49, %v416
  %v455 = vmul.f32 %v50, %v416
  %v456 = vmul.f32 %v51, %v416
  %v457 = vmul.f32 %v52, %v416
  %v458 = vmul.f32 %v53, %v416
  %v459 = vmul.f32 %v54, %v416
  %v460 = vmul.f32 %v55, %v416
  %v461 = vmul.f32 %v56, %v416
  %v462 = vmul.f32 %v57, %v416
  %v463 = vmul.f32 %v58, %v416
  %v464 = vmul.f32 %v59, %v416
  %v465 = vmul.f32 %v60, %v416
  %v466 = vmul.f32 %v61, %v416
  %v467 = vmul.f32 %v62, %v416
  %v468 = vmul.f32 %v63, %v416
  %v469 = vmul.f32 %v64, %v416
  %v470 = vmul.f32 %v65, %v416
  %v471 = vmul.f32 %v66, %v416
  %v472 = vmul.f32 %v67, %v416
  %v473 = vmul.f32 %v68, %v416
  %v474 = vmul.f32 %v69, %v416
  %v475 = vmul.f32 %v70, %v416
  %v476 = vmul.f32 %v71, %v416
  %v477 = vmul.f32 %v72, %v416
  %v478 = vmul.f32 %v73, %v416
  %v479 = vmul.f32 %v74, %v416
  %v480 = vmul.f32 %v75, %v416
  %v481 = vmul.f32 %v76, %v416
  %v482 = vmul.f32 %v77, %v416
  %483 = vst.msk [vmem:[%s3] sm:$0xff] %vm78, %v419
  %484 = vst.msk [vmem:[%s3 + $0x8] sm:$0xff] %vm78, %v420
  %485 = vst.msk [vmem:[%s3 + $0x10] sm:$0xff] %vm78, %v421
  %486 = vst.msk [vmem:[%s3 + $0x18] sm:$0xff] %vm78, %v422
  %487 = vst.msk [vmem:[%s3 + $0x20] sm:$0xff] %vm78, %v423
  %488 = vst.msk [vmem:[%s3 + $0x28] sm:$0xff] %vm78, %v424
  %489 = vst.msk [vmem:[%s3 + $0x30] sm:$0xff] %vm78, %v425
  %490 = vst.msk [vmem:[%s3 + $0x38] sm:$0xff] %vm78, %v426
  %491 = vst.msk [vmem:[%s3 + $0x40] sm:$0xff] %vm78, %v427
  %492 = vst.msk [vmem:[%s3 + $0x48] sm:$0xff] %vm78, %v428
  %493 = vst.msk [vmem:[%s3 + $0x50] sm:$0xff] %vm78, %v429
  %494 = vst.msk [vmem:[%s3 + $0x58] sm:$0xff] %vm78, %v430
  %495 = vst.msk [vmem:[%s3 + $0x60] sm:$0xff] %vm78, %v431
  %496 = vst.msk [vmem:[%s3 + $0x68] sm:$0xff] %vm78, %v432
  %497 = vst.msk [vmem:[%s3 + $0x70] sm:$0xff] %vm78, %v433
  %498 = vst.msk [vmem:[%s3 + $0x78] sm:$0xff] %vm78, %v434
  %499 = vst.msk [vmem:[%s3 + $0x80] sm:$0xff] %vm78, %v435
  %500 = vst.msk [vmem:[%s3 + $0x88] sm:$0xff] %vm78, %v436
  %501 = vst.msk [vmem:[%s3 + $0x90] sm:$0xff] %vm78, %v437
  %502 = vst.msk [vmem:[%s3 + $0x98] sm:$0xff] %vm78, %v438
  %503 = vst.msk [vmem:[%s3 + $0xa0] sm:$0xff] %vm78, %v439
  %504 = vst.msk [vmem:[%s3 + $0xa8] sm:$0xff] %vm78, %v440
  %505 = vst.msk [vmem:[%s3 + $0xb0] sm:$0xff] %vm78, %v441
  %506 = vst.msk [vmem:[%s3 + $0xb8] sm:$0xff] %vm78, %v442
  %507 = vst.msk [vmem:[%s3 + $0xc0] sm:$0xff] %vm78, %v443
  %508 = vst.msk [vmem:[%s3 + $0xc8] sm:$0xff] %vm78, %v444
  %509 = vst.msk [vmem:[%s3 + $0xd0] sm:$0xff] %vm78, %v445
  %510 = vst.msk [vmem:[%s3 + $0xd8] sm:$0xff] %vm78, %v446
  %511 = vst.msk [vmem:[%s3 + $0xe0] sm:$0xff] %vm78, %v447
  %512 = vst.msk [vmem:[%s3 + $0xe8] sm:$0xff] %vm78, %v448
  %513 = vst.msk [vmem:[%s3 + $0xf0] sm:$0xff] %vm78, %v449
  %514 = vst.msk [vmem:[%s3 + $0xf8] sm:$0xff] %vm78, %v450
  %515 = vst.msk [vmem:[%s3 + $0x100] sm:$0xff] %vm78, %v451
  %516 = vst.msk [vmem:[%s3 + $0x108] sm:$0xff] %vm78, %v452
  %517 = vst.msk [vmem:[%s3 + $0x110] sm:$0xff] %vm78, %v453
  %518 = vst.msk [vmem:[%s3 + $0x118] sm:$0xff] %vm78, %v454
  %519 = vst.msk [vmem:[%s3 + $0x120] sm:$0xff] %vm78, %v455
  %520 = vst.msk [vmem:[%s3 + $0x128] sm:$0xff] %vm78, %v456
  %521 = vst.msk [vmem:[%s3 + $0x130] sm:$0xff] %vm78, %v457
  %522 = vst.msk [vmem:[%s3 + $0x138] sm:$0xff] %vm78, %v458
  %523 = vst.msk [vmem:[%s3 + $0x140] sm:$0xff] %vm78, %v459
  %524 = vst.msk [vmem:[%s3 + $0x148] sm:$0xff] %vm78, %v460
  %525 = vst.msk [vmem:[%s3 + $0x150] sm:$0xff] %vm78, %v461
  %526 = vst.msk [vmem:[%s3 + $0x158] sm:$0xff] %vm78, %v462
  %527 = vst.msk [vmem:[%s3 + $0x160] sm:$0xff] %vm78, %v463
  %528 = vst.msk [vmem:[%s3 + $0x168] sm:$0xff] %vm78, %v464
  %529 = vst.msk [vmem:[%s3 + $0x170] sm:$0xff] %vm78, %v465
  %530 = vst.msk [vmem:[%s3 + $0x178] sm:$0xff] %vm78, %v466
  %531 = vst.msk [vmem:[%s3 + $0x180] sm:$0xff] %vm78, %v467
  %532 = vst.msk [vmem:[%s3 + $0x188] sm:$0xff] %vm78, %v468
  %533 = vst.msk [vmem:[%s3 + $0x190] sm:$0xff] %vm78, %v469
  %534 = vst.msk [vmem:[%s3 + $0x198] sm:$0xff] %vm78, %v470
  %535 = vst.msk [vmem:[%s3 + $0x1a0] sm:$0xff] %vm78, %v471
  %536 = vst.msk [vmem:[%s3 + $0x1a8] sm:$0xff] %vm78, %v472
  %537 = vst.msk [vmem:[%s3 + $0x1b0] sm:$0xff] %vm78, %v473
  %538 = vst.msk [vmem:[%s3 + $0x1b8] sm:$0xff] %vm78, %v474
  %539 = vst.msk [vmem:[%s3 + $0x1c0] sm:$0xff] %vm78, %v475
  %540 = vst.msk [vmem:[%s3 + $0x1c8] sm:$0xff] %vm78, %v476
  %541 = vst.msk [vmem:[%s3 + $0x1d0] sm:$0xff] %vm78, %v477
  %542 = vst.msk [vmem:[%s3 + $0x1d8] sm:$0xff] %vm78, %v478
  %543 = vst.msk [vmem:[%s3 + $0x1e0] sm:$0xff] %vm78, %v479
  %544 = vst.msk [vmem:[%s3 + $0x1e8] sm:$0xff] %vm78, %v480
  %545 = vst.msk [vmem:[%s3 + $0x1f0] sm:$0xff] %vm78, %v481
  %546 = vst.msk [vmem:[%s3 + $0x1f8] sm:$0xff] %vm78, %v482
  // Predicated region
  $region14: #{tpu_custom_call.1} parent=0 // pred_check
    _
  $region15: #{tpu_custom_call.1} parent=0 // pred_check_branch
    %548 = sbr.rel (0) target = $region17
  $region16: #{tpu_custom_call.1} parent=0 // pred_region
    _
  $region17: #{tpu_custom_call.1} parent=0 // pred_fallthru
    _
  // Predicated region
  $region18: #{tpu_custom_call.1} parent=0 // pred_check
    _
  $region19: #{tpu_custom_call.1} parent=0 // pred_check_branch
    %550 = sbr.rel (0) target = $region21
  $region20: #{tpu_custom_call.1} parent=0 // pred_region
    _
  $region21: #{tpu_custom_call.1} parent=0 // pred_fallthru
    _

</llo_original>
